<compile_context>
chip_gen: v7x
topology: tpu7x:2x2x1
jax: 0.10.0
libtpu: 0.0.40
codegen_flags: <defaults>
</compile_context>

<pallas_src>
import functools

import jax
import jax.numpy as jnp
from jax.experimental import pallas as pl
from jax.experimental.pallas import tpu as pltpu


def _eca_kernel(w_ref, x_ref, o_ref, *, k_size, inv_hw):
    # w_ref: (k,) f32 conv weights in SMEM
    # x_ref: (Bb, C, HW) block, native dtype
    # o_ref: (Bb, C, HW) output block, native dtype
    x = x_ref[...]                                           # native dtype

    # Global average pool with f32 accumulation (divide by the real HW).
    pooled = jnp.sum(x, axis=-1, keepdims=True, dtype=jnp.float32) * inv_hw  # (Bb, C, 1)

    bb, c, _ = pooled.shape
    pad = (k_size - 1) // 2

    # k-tap cross-correlation along the channel axis with zero padding:
    #   y[c] = sum_t w[t] * pooled[c + t - pad]
    # Simple concatenate-based shifts on the tiny (Bb, C, 1) column; this is
    # negligible next to the HBM-bound tile traffic and is known to lower.
    y = jnp.zeros_like(pooled)
    for t in range(k_size):
        s = t - pad
        if s == 0:
            shifted = pooled
        elif s > 0:
            shifted = jnp.concatenate(
                [pooled[:, s:, :], jnp.zeros((bb, s, 1), jnp.float32)], axis=1)
        else:
            shifted = jnp.concatenate(
                [jnp.zeros((bb, -s, 1), jnp.float32), pooled[:, : c + s, :]], axis=1)
        y = y + w_ref[t] * shifted                           # scalar (SMEM) * f32 column

    gate = jax.nn.sigmoid(y)                                 # (Bb, C, 1) f32
    # Rescale in the input dtype (gate cast per-channel, broadcast over lanes).
    o_ref[...] = x * gate.astype(x.dtype)


def _largest_divisor_leq(n, cap):
    cap = max(1, min(n, cap))
    for d in range(cap, 0, -1):
        if n % d == 0:
            return d
    return 1


def _round_up(n, m):
    return ((n + m - 1) // m) * m


def eca_forward(x, conv_weight):
    """x: (B, C, H, W); conv_weight: any shape with k elements (e.g. (1,1,3)).

    Returns (B, C, H, W), same dtype as x.
    """
    B, C, H, W = x.shape
    HW = H * W
    w = jnp.asarray(conv_weight, jnp.float32).reshape(-1)    # (k,)
    k_size = int(w.shape[0])

    # Flatten spatial dims (free reshape: trailing-dim merge) so the lane axis
    # is HW.  No zero padding -- avoids an extra HBM round-trip of x.
    x_flat = x.reshape(B, C, HW)

    itemsize = jnp.dtype(x.dtype).itemsize
    # Honest padded-tile footprint in VMEM: sublane packing depends on dtype
    # (f32 -> 8, bf16 -> 16, int8 -> 32 sublanes per vreg), lanes pad to 128.
    sublane = max(8, 32 // max(1, itemsize))
    per_batch_tile_bytes = _round_up(C, sublane) * _round_up(HW, 128) * itemsize

    # Group batch elements per grid step to amortize the ~0.35us step overhead,
    # but keep >= 2 grid steps (for megacore / 2 TCs on v7x) whenever each half
    # of the work is still big enough to matter.
    TARGET_BLOCK_BYTES = 4 << 20
    bb = _largest_divisor_leq(B, max(1, TARGET_BLOCK_BYTES // per_batch_tile_bytes))
    nb = B // bb
    if nb == 1 and B >= 2 and per_batch_tile_bytes * (B // 2) >= (1 << 20):
        bb = _largest_divisor_leq(B, B // 2)
        nb = B // bb

    # Explicit VMEM budget: double-buffered input + output blocks, plus a
    # conservative f32 temp for the pooling upcast (only really paid for
    # sub-f32 inputs), plus slack.  Capped under v7x's 64 MiB physical VMEM.
    block_bytes = bb * per_batch_tile_bytes
    f32_tmp = bb * _round_up(C, sublane) * _round_up(HW, 128) * 4
    needed = 4 * block_bytes + f32_tmp + (2 << 20)
    vmem_limit = int(min(max(needed, 24 << 20), 48 << 20))
    # TODO(synk): for a single image whose (C, H*W) block exceeds this VMEM
    # budget, add a channel-tiled variant with a 1-channel halo for the conv
    # (never hit for typical ECA placements inside CNN backbones).

    kernel = functools.partial(_eca_kernel, k_size=k_size, inv_hw=1.0 / float(HW))

    out = pl.pallas_call(
        kernel,
        out_shape=jax.ShapeDtypeStruct((B, C, HW), x.dtype),
        grid_spec=pltpu.PrefetchScalarGridSpec(
            num_scalar_prefetch=0,
            grid=(nb,),
            in_specs=[
                pl.BlockSpec(memory_space=pltpu.MemorySpace.SMEM),   # (k,) weights
                pl.BlockSpec((bb, C, HW), lambda b: (b, 0, 0)),      # x block
            ],
            out_specs=pl.BlockSpec((bb, C, HW), lambda b: (b, 0, 0)),
        ),
        compiler_params=pltpu.CompilerParams(
            dimension_semantics=("parallel",),
            vmem_limit_bytes=vmem_limit,
        ),
    )(w, x_flat)

    return out.reshape(B, C, H, W)


if __name__ == "__main__":
    # Small, deterministic example consistent with the module's forward.
    B, C, H, W = 2, 8, 16, 16
    k_size = 3

    key = jax.random.PRNGKey(0)
    kx, kw = jax.random.split(key)
    x = jax.random.normal(kx, (B, C, H, W), dtype=jnp.float32)

    # Deterministic stand-in for nn.Conv1d(1, 1, 3, bias=False) weights,
    # PyTorch shape (out=1, in=1, k=3).
    bound = 1.0 / (1 * k_size) ** 0.5   # kaiming-uniform bound used by PyTorch
    conv_weight = (jax.random.uniform(kw, (1, 1, k_size), dtype=jnp.float32) * 2.0 - 1.0) * bound

    out = eca_forward(x, conv_weight)
    jax.block_until_ready(out)

    # Pure-JAX reference of the same math.
    w = conv_weight.reshape(-1)
    pooled_ref = jnp.mean(x, axis=(2, 3))                               # (B, C)
    padded = jnp.pad(pooled_ref, ((0, 0), (1, 1)))                      # (B, C+2)
    y_ref = (w[0] * padded[:, :-2]
             + w[1] * padded[:, 1:-1]
             + w[2] * padded[:, 2:])                                    # (B, C)
    gate_ref = jax.nn.sigmoid(y_ref)[:, :, None, None]
    feat_ref = x * gate_ref

    assert out.shape == x.shape and out.dtype == x.dtype
    assert jnp.allclose(out, feat_ref, atol=1e-5, rtol=1e-5), "mismatch vs reference"
    print("KERNEL_OK")
</pallas_src>

<mosaic_0001>
module attributes {stable_mosaic.version = 11 : i64} {
  func.func @_eca_kernel(%arg0: i32, %arg1: memref<3xf32, #tpu.memory_space<smem>>, %arg2: memref<2x8x256xf32, #tpu.memory_space<vmem>>, %arg3: memref<2x8x256xf32, #tpu.memory_space<vmem>>) attributes {dimension_semantics = [#tpu.dimension_semantics<parallel>], iteration_bounds = array<i64: 1>, scalar_prefetch = 0 : i64, scratch_operands = 0 : i64, tpu.core_type = #tpu.core_type<tc>, window_params = [{transform_indices = @transform_0, window_bounds = array<i64: 3>}, {transform_indices = @transform_1, window_bounds = array<i64: 2, 8, 256>}, {transform_indices = @transform_2, window_bounds = array<i64: 2, 8, 256>}]} {
    %c0 = arith.constant 0 : index
    %c0_0 = arith.constant 0 : index
    %c0_1 = arith.constant 0 : index
    %0 = vector.load %arg2[%c0, %c0_0, %c0_1] : memref<2x8x256xf32, #tpu.memory_space<vmem>>, vector<2x8x256xf32>
    %cst = arith.constant dense<0.000000e+00> : vector<2x8xf32>
    %1 = vector.multi_reduction <add>, %0, %cst [2] : vector<2x8x256xf32> to vector<2x8xf32>
    %2 = vector.shape_cast %1 : vector<2x8xf32> to vector<2x8x1xf32>
    %cst_2 = arith.constant 3.906250e-03 : f32
    %3 = vector.broadcast %cst_2 : f32 to vector<2x8x1xf32>
    %4 = arith.mulf %2, %3 : vector<2x8x1xf32>
    %cst_3 = arith.constant 0.000000e+00 : f32
    %5 = vector.broadcast %cst_3 : f32 to vector<2x8x1xf32>
    %cst_4 = arith.constant 0.000000e+00 : f32
    %6 = vector.broadcast %cst_4 : f32 to vector<2x1x1xf32>
    %7 = vector.extract_strided_slice %4 {offsets = [0, 0, 0], sizes = [2, 7, 1], strides = [1, 1, 1]} : vector<2x8x1xf32> to vector<2x7x1xf32>
    %8 = tpu.concatenate %6, %7 in 1 : vector<2x1x1xf32>, vector<2x7x1xf32> -> vector<2x8x1xf32>
    %c0_5 = arith.constant 0 : index
    %9 = memref.load %arg1[%c0_5] : memref<3xf32, #tpu.memory_space<smem>>
    %10 = vector.broadcast %9 : f32 to vector<2x8x1xf32>
    %11 = arith.mulf %10, %8 : vector<2x8x1xf32>
    %12 = arith.addf %5, %11 : vector<2x8x1xf32>
    %c1 = arith.constant 1 : index
    %13 = memref.load %arg1[%c1] : memref<3xf32, #tpu.memory_space<smem>>
    %14 = vector.broadcast %13 : f32 to vector<2x8x1xf32>
    %15 = arith.mulf %14, %4 : vector<2x8x1xf32>
    %16 = arith.addf %12, %15 : vector<2x8x1xf32>
    %17 = vector.extract_strided_slice %4 {offsets = [0, 1, 0], sizes = [2, 7, 1], strides = [1, 1, 1]} : vector<2x8x1xf32> to vector<2x7x1xf32>
    %cst_6 = arith.constant 0.000000e+00 : f32
    %18 = vector.broadcast %cst_6 : f32 to vector<2x1x1xf32>
    %19 = tpu.concatenate %17, %18 in 1 : vector<2x7x1xf32>, vector<2x1x1xf32> -> vector<2x8x1xf32>
    %c2 = arith.constant 2 : index
    %20 = memref.load %arg1[%c2] : memref<3xf32, #tpu.memory_space<smem>>
    %21 = vector.broadcast %20 : f32 to vector<2x8x1xf32>
    %22 = arith.mulf %21, %19 : vector<2x8x1xf32>
    %23 = arith.addf %16, %22 : vector<2x8x1xf32>
    %24 = arith.negf %23 : vector<2x8x1xf32>
    %25 = math.exp %24 : vector<2x8x1xf32>
    %cst_7 = arith.constant 1.000000e+00 : f32
    %26 = vector.broadcast %cst_7 : f32 to vector<2x8x1xf32>
    %27 = arith.addf %26, %25 : vector<2x8x1xf32>
    %28 = arith.divf %26, %27 : vector<2x8x1xf32>
    %29 = vector.broadcast %28 : vector<2x8x1xf32> to vector<2x8x256xf32>
    %30 = arith.mulf %0, %29 : vector<2x8x256xf32>
    %c0_8 = arith.constant 0 : index
    %c0_9 = arith.constant 0 : index
    %c0_10 = arith.constant 0 : index
    %31 = vector.load %arg3[%c0_8, %c0_9, %c0_10] : memref<2x8x256xf32, #tpu.memory_space<vmem>>, vector<2x8x256xf32>
    tpu.vector_store %arg3[%c0_8, %c0_9, %c0_10], %30 {strides = array<i32>} : memref<2x8x256xf32, #tpu.memory_space<vmem>>, vector<2x8x256xf32>,
    return
  }
  func.func @transform_0(%arg0: i32) -> i32 {
    %c0_i32 = arith.constant 0 : i32
    %c0_i32_0 = arith.constant 0 : i32
    return %c0_i32 : i32
  }
  func.func @transform_1(%arg0: i32) -> (i32, i32, i32) {
    %c0_i32 = arith.constant 0 : i32
    %c0_i32_0 = arith.constant 0 : i32
    %c0_i32_1 = arith.constant 0 : i32
    return %arg0, %c0_i32, %c0_i32_0 : i32, i32, i32
  }
  func.func @transform_2(%arg0: i32) -> (i32, i32, i32) {
    %c0_i32 = arith.constant 0 : i32
    %c0_i32_0 = arith.constant 0 : i32
    %c0_i32_1 = arith.constant 0 : i32
    return %arg0, %c0_i32, %c0_i32_0 : i32, i32, i32
  }
}

</mosaic_0001>

<llo_original>
// kernel: tpu_custom_call.1
$region0: #{tpu_custom_call.1}
  #allocation0 [shape = 'u32[]', space=smem, size = 0x4, offset = 0x4, fixed_abs, tag = 'smem constant byte address 0x4 - core index']
  #allocation1 [shape = 'u32[144,128]{1,0:T(1,128)}', space=vmem, size = 0x12000, scoped, tag = 'internal scratch']
  %s0 = inlined_call_operand.hbm [shape: f32[3], index: 0, kind: input, shape index: {}]
  %s1 = inlined_call_operand.hbm [shape: f32[2,8,256], index: 1, kind: input, shape index: {}]
  %s2 = inlined_call_operand.hbm [shape: f32[2,8,256], index: 2, kind: output, shape index: {}]
  %s3 = sld [smem:[#allocation0]]
  $region26: #{tpu_custom_call.1} parent=0
    _
  %s5 = ssub.s32 1, %s3
  %s6 = scalar_select 0, %s5, %s3
  $region1: #{tpu_custom_call.1} parent=0
    #allocation2 [shape = 'u8[512]{0}', space=smem, size = 0x200, scoped, tag = 'input window, operand 0, single buffered']
    #allocation3 [shape = 's32[1]{0}', space=sflag, size = 0x4, scoped, tag = 'scoped memory for tpu_custom_call.1']
    #allocation4 [shape = 's32[1]{0}', space=sflag, size = 0x4, scoped, tag = 'scoped memory for tpu_custom_call.1']
    #allocation5 [shape = 's32[1]{0}', space=sflag, size = 0x4, scoped, tag = 'scoped memory for tpu_custom_call.1']
    #allocation6 [shape = 'u8[16384]{0}', space=vmem, size = 0x4000, scoped, tag = 'input window, operand 1, single buffered']
    #allocation7 [shape = 'u8[16384]{0}', space=vmem, size = 0x4000, scoped, tag = 'output window, operand 0, single buffered']
    %7 = vsyncpa [#allocation5], 0
    %8 = vsyncpa [#allocation3], 0
    %9 = vsyncpa [#allocation4], 0
    // Predicated region
    $region2: #{tpu_custom_call.1} parent=1 // pred_check
      _
    $region3: #{tpu_custom_call.1} parent=1 // pred_check_branch
      %11 = sbr.rel (0) target = $region5
    $region4: #{tpu_custom_call.1} parent=1 // pred_region
      %s13 = ssub.s32 16, 16
      %14 = vsyncadd [#allocation5], %s13
      %17 = dma.hbm_to_smem %s0, 16, [#allocation2], [#allocation5]
    $region5: #{tpu_custom_call.1} parent=1 // pred_fallthru
      _
    // Predicated region
    $region6: #{tpu_custom_call.1} parent=1 // pred_check
      _
    $region7: #{tpu_custom_call.1} parent=1 // pred_check_branch
      %19 = sbr.rel (0) target = $region9
    $region8: #{tpu_custom_call.1} parent=1 // pred_region
      %s21 = ssub.s32 512, 512
      %22 = vsyncadd [#allocation3], %s21
      %s23 = sshll.u32 [#allocation6], 4
      %s24 = int_to_ptr.vmem [resolvable:$true] %s23
      %29 = dma.hbm_to_vmem [thread:$0]  %s1, 512, %s24, [#allocation3], 256, 256, 16
    $region9: #{tpu_custom_call.1} parent=1 // pred_fallthru
      _
    // Predicated region
    $region10: #{tpu_custom_call.1} parent=1 // pred_check
      _
    $region11: #{tpu_custom_call.1} parent=1 // pred_check_branch
      %31 = sbr.rel (0) target = $region13
    $region12: #{tpu_custom_call.1} parent=1 // pred_region
      %32 = dma.done [#allocation5], 16
    $region13: #{tpu_custom_call.1} parent=1 // pred_fallthru
      _
    // Predicated region
    $region14: #{tpu_custom_call.1} parent=1 // pred_check
      _
    $region15: #{tpu_custom_call.1} parent=1 // pred_check_branch
      %34 = sbr.rel (0) target = $region17
    $region16: #{tpu_custom_call.1} parent=1 // pred_region
      %35 = dma.done [#allocation3], 512
    $region17: #{tpu_custom_call.1} parent=1 // pred_fallthru
      _
    %36 = sfence
    %v37 = vld [vmem:[#allocation6] sm:$0xff]
    %v38 = vld [vmem:[#allocation6 + $0x8] sm:$0xff]
    %v39 = vld [vmem:[#allocation6 + $0x10] sm:$0xff]
    %v40 = vld [vmem:[#allocation6 + $0x18] sm:$0xff]
    %v41 = vadd.f32 %v37, %v38
    %42 = vadd.xlane.f32.xlu0 %v41
    %v43 = vpop.xlane.xlu0 %42
    %v44 = vadd.f32 %v39, %v40
    %45 = vadd.xlane.f32.xlu0 %v44
    %v46 = vpop.xlane.xlu0 %45
    %v47 = vmul.f32 %v43, 0.00390625
    %v48 = vmul.f32 %v46, 0.00390625
    %v51 = vrot.slane %v47, 7
    %v52 = vrot.slane %v48, 7
    %vm55 = vcmask 1040384
    %v56 = vsel %vm55, 0.0, %v51
    %v57 = vsel %vm55, 0.0, %v52
    %s58 = sld [smem:[#allocation2]]
    %v59 = vstv %s58
    %v60 = vmul.f32 %v59, %v56
    %v61 = vmul.f32 %v59, %v57
    %v62 = vadd.f32 %v60, 0.0
    %v63 = vadd.f32 %v61, 0.0
    %s64 = sld [smem:[#allocation2 + $0x1]]
    %v65 = vstv %s64
    %v66 = vmul.f32 %v65, %v47
    %v67 = vmul.f32 %v65, %v48
    %v68 = vadd.f32 %v62, %v66
    %v69 = vadd.f32 %v63, %v67
    %v70 = vrot.slane %v47, 1
    %v71 = vrot.slane %v48, 1
    %vm74 = vcmask 1046528
    %v75 = vsel %vm74, %v70, 0.0
    %v76 = vsel %vm74, %v71, 0.0
    %s77 = sld [smem:[#allocation2 + $0x2]]
    %v78 = vstv %s77
    %v79 = vmul.f32 %v78, %v75
    %v80 = vmul.f32 %v78, %v76
    %v81 = vadd.f32 %v68, %v79
    %v82 = vadd.f32 %v69, %v80
    %v83 = vxor.u32 %v81, 2147483648
    %v84 = vxor.u32 %v82, 2147483648
    %v85 = vmul.f32 %v83, 1.442695
    %v86 = vpow.pop %v85
    %v87 = vmul.f32 %v84, 1.442695
    %v88 = vpow.pop %v87
    %v89 = vadd.f32 %v86, 1.0
    %v90 = vadd.f32 %v88, 1.0
    %v91 = vrcp.pop %v89
    %v92 = vmul.f32 1.0, %v91
    %v93 = vrcp.pop %v90
    %v94 = vmul.f32 1.0, %v93
    %96 = vset.pattern.permute.xlu0 0
    %97 = vperm.xlu0 %96, %v92
    %v98 = vpop.permute.xlu0 %97
    %101 = vset.pattern.permute.xlu0 0
    %102 = vperm.xlu0 %101, %v94
    %v103 = vpop.permute.xlu0 %102
    %v105 = vmul.f32 %v37, %v98
    %v106 = vmul.f32 %v38, %v98
    %v107 = vmul.f32 %v39, %v103
    %v108 = vmul.f32 %v40, %v103
    %109 = vst [vmem:[#allocation7] sm:$0xff] %v105
    %110 = vst [vmem:[#allocation7 + $0x8] sm:$0xff] %v106
    %111 = vst [vmem:[#allocation7 + $0x10] sm:$0xff] %v107
    %112 = vst [vmem:[#allocation7 + $0x18] sm:$0xff] %v108
    // Predicated region
    $region18: #{tpu_custom_call.1} parent=1 // pred_check
      _
    $region19: #{tpu_custom_call.1} parent=1 // pred_check_branch
      %114 = sbr.rel (0) target = $region21
    $region20: #{tpu_custom_call.1} parent=1 // pred_region
      %s116 = ssub.s32 512, 512
      %117 = vsyncadd [#allocation4], %s116
      %s118 = sshll.u32 [#allocation7], 4
      %s119 = int_to_ptr.vmem [resolvable:$true] %s118
      %124 = dma.vmem_to_hbm [thread:$0]  %s119, 512, %s2, [#allocation4], 256, 256, 16
    $region21: #{tpu_custom_call.1} parent=1 // pred_fallthru
      _
    // Predicated region
    $region22: #{tpu_custom_call.1} parent=1 // pred_check
      _
    $region23: #{tpu_custom_call.1} parent=1 // pred_check_branch
      %126 = sbr.rel (0) target = $region25
    $region24: #{tpu_custom_call.1} parent=1 // pred_region
      %127 = dma.done [#allocation4], 512
    $region25: #{tpu_custom_call.1} parent=1 // pred_fallthru
      _
    %128 = vsyncpa [#allocation3], 1
    %129 = vsyncpa [#allocation4], 1
    %130 = vsyncpa [#allocation5], 1

</llo_original>
